<compile_context>
chip_gen: v7x
topology: tpu7x:2x2x1
jax: 0.10.0
libtpu: 0.0.40
codegen_flags: <defaults>
</compile_context>

<pallas_src>
import functools

import jax
import jax.numpy as jnp
import numpy as np
from jax.experimental import pallas as pl
from jax.experimental.pallas import tpu as pltpu


def _roll(x, shift, axis):
    """pltpu.roll (jnp.roll semantics) with the static shift normalized >= 0."""
    return pltpu.roll(x, shift % x.shape[axis], axis)


def _round_up(n, m):
    return pl.cdiv(n, m) * m


# ---------------------------------------------------------------------------
# Shared ConvLSTM cell math (used by both sequence kernels)
# ---------------------------------------------------------------------------
def _lstm_cell_step(mask, w, b, x, h_prev_f32, c_prev_f32, row_stride):
    """One ConvLSTM cell step in padded-flat (channels, P) layout.

    mask : (1, P)    1.0 on interior pixels, 0.0 on the pad ring / lane pad
    w    : (3*4Ch, 3*(Cx+Ch)) per-dy row blocks, K = 3 dx-taps of [x, h]
    b    : (4Ch, 1)
    x    : (Cx, P)   this step's input (zero on pad ring)
    h/c  : (Ch, P)   f32 previous state (zero on pad ring)
    """
    Ch = h_prev_f32.shape[0]
    G = 4 * Ch

    # 3 dx-taps (pixel offsets -1, 0, +1) stacked on the contraction axis via
    # lane rotations: one MXU matmul per step instead of 9 slice+matmul passes.
    def dx_taps(a):
        return jnp.concatenate([_roll(a, 1, 1), a, _roll(a, -1, 1)], axis=0)

    h_prev = h_prev_f32.astype(x.dtype)
    xh_taps = jnp.concatenate([dx_taps(x), dx_taps(h_prev)], axis=0)

    gates = jax.lax.dot_general(
        w, xh_taps,
        dimension_numbers=(((1,), (0,)), ((), ())),
        preferred_element_type=jnp.float32)                    # (3*G, P)

    # Fold the 3 dy row-blocks with lane rotations of the result (wrap-around
    # only touches the pad ring / lane padding, which is masked below).
    acc = (b
           + _roll(gates[0 * G:1 * G, :], row_stride, 1)       # dy = 0
           + gates[1 * G:2 * G, :]                             # dy = 1
           + _roll(gates[2 * G:3 * G, :], -row_stride, 1))     # dy = 2

    i_g = jax.nn.sigmoid(acc[0 * Ch:1 * Ch, :])
    f_g = jax.nn.sigmoid(acc[1 * Ch:2 * Ch, :])
    o_g = jax.nn.sigmoid(acc[2 * Ch:3 * Ch, :])
    g_g = jnp.tanh(acc[3 * Ch:4 * Ch, :])

    c_next = (f_g * c_prev_f32 + i_g * g_g) * mask
    h_next = o_g * jnp.tanh(c_next) * mask                     # keep pad ring 0
    return h_next, c_next


# ---------------------------------------------------------------------------
# Pallas kernels
# ---------------------------------------------------------------------------
def _convlstm_seq_kernel(mask_ref, w_ref, b_ref, x_ref, hout_ref, h_st, c_st,
                         *, row_stride):
    """One ConvLSTM step (non-final layer); grid=(B, T); h/c in VMEM scratch."""
    t = pl.program_id(1)

    @pl.when(t == 0)
    def _():
        h_st[...] = jnp.zeros_like(h_st)
        c_st[...] = jnp.zeros_like(c_st)

    h_next, c_next = _lstm_cell_step(
        mask_ref[...], w_ref[...], b_ref[...], x_ref[0, 0],
        h_st[...], c_st[...], row_stride)

    h_st[...] = h_next
    c_st[...] = c_next
    hout_ref[0, 0] = h_next.astype(hout_ref.dtype)


def _convlstm_last_fused_kernel(mask_ref, wl_ref, bl_ref, w1_ref, b1_ref,
                                x_ref, xlast_ref, out_ref, h_st, c_st,
                                *, row_stride):
    """Final ConvLSTM layer fused with conv1by1(last key) + residual add.

    w1_ref   : (1, Ch, Cx)       this step's slice of the 1x1 conv weight
    b1_ref   : (1, Ch, 1)        matching bias slice
    xlast_ref: (1, 1, Cx, P)     last BEV key (constant across the T axis)
    out_ref  : (1, 1, Ch, P)     final output block for channels [t*Ch,(t+1)*Ch)
    """
    t = pl.program_id(1)

    @pl.when(t == 0)
    def _():
        h_st[...] = jnp.zeros_like(h_st)
        c_st[...] = jnp.zeros_like(c_st)

    h_next, c_next = _lstm_cell_step(
        mask_ref[...], wl_ref[...], bl_ref[...], x_ref[0, 0],
        h_st[...], c_st[...], row_stride)

    h_st[...] = h_next
    c_st[...] = c_next

    # conv1by1 on the last BEV key + ConvLSTM residual add, all in VMEM.
    y = jax.lax.dot_general(
        w1_ref[0], xlast_ref[0, 0],
        dimension_numbers=(((1,), (0,)), ((), ())),
        preferred_element_type=jnp.float32) + b1_ref[0]
    out_ref[0, 0] = (y + h_next).astype(out_ref.dtype)


def _conv1x1_kernel(w_ref, b_ref, x_ref, out_ref):
    """conv1by1 only (mm_no_residual=True path)."""
    y = jax.lax.dot_general(
        w_ref[...], x_ref[0, 0],
        dimension_numbers=(((1,), (0,)), ((), ())),
        preferred_element_type=jnp.float32) + b_ref[...]
    out_ref[0] = y.astype(out_ref.dtype)


# ---------------------------------------------------------------------------
# Wrappers (pallas_call plumbing)
# ---------------------------------------------------------------------------
_VMEM_LIMIT = 48 * 1024 * 1024  # > 16/32 MiB scoped default, < 64 MiB physical


def convlstm_layer(x_seq, w_prep, b_prep, mask, *, width):
    """Run one (non-final) ConvLSTM layer over the whole (B, T) sequence.

    x_seq: (B, T, Cx, P) padded-flat inputs.  Returns (B, T, Ch, P) hiddens.
    """
    B, T, Cx, P = x_seq.shape
    G = b_prep.shape[0]
    Ch = G // 4
    Kdim = w_prep.shape[1]

    kernel = functools.partial(_convlstm_seq_kernel, row_stride=width + 2)
    return pl.pallas_call(
        kernel,
        out_shape=jax.ShapeDtypeStruct((B, T, Ch, P), x_seq.dtype),
        grid=(B, T),
        in_specs=[
            pl.BlockSpec((1, P), lambda b, t: (0, 0)),
            pl.BlockSpec((3 * G, Kdim), lambda b, t: (0, 0)),
            pl.BlockSpec((G, 1), lambda b, t: (0, 0)),
            pl.BlockSpec((1, 1, Cx, P), lambda b, t: (b, t, 0, 0)),
        ],
        out_specs=pl.BlockSpec((1, 1, Ch, P), lambda b, t: (b, t, 0, 0)),
        scratch_shapes=[pltpu.VMEM((Ch, P), jnp.float32),
                        pltpu.VMEM((Ch, P), jnp.float32)],
        compiler_params=pltpu.CompilerParams(
            dimension_semantics=("parallel", "arbitrary"),
            vmem_limit_bytes=_VMEM_LIMIT),
    )(mask, w_prep, b_prep, x_seq)


def convlstm_last_layer_fused(x_seq, x_pad, w_prep, b_prep, w1_k, b1_k, mask,
                              *, width):
    """Final ConvLSTM layer fused with conv1by1(last key) + residual add.

    x_seq: (B, T, Cx, P) last-layer inputs (original x for num_layers == 1,
           otherwise the previous layer's hidden stack).
    x_pad: (B, K, C, P)  original padded BEV keys (conv1by1 reads key K-1).
    Returns (B, T, Ch, P); channel o of the final output is block (t, c).
    """
    B, T, Cx, P = x_seq.shape
    G = b_prep.shape[0]
    Ch = G // 4
    Kdim = w_prep.shape[1]
    K = x_pad.shape[1]
    Cin = x_pad.shape[2]

    kernel = functools.partial(_convlstm_last_fused_kernel,
                               row_stride=width + 2)
    return pl.pallas_call(
        kernel,
        out_shape=jax.ShapeDtypeStruct((B, T, Ch, P), x_seq.dtype),
        grid=(B, T),
        in_specs=[
            pl.BlockSpec((1, P), lambda b, t: (0, 0)),
            pl.BlockSpec((3 * G, Kdim), lambda b, t: (0, 0)),
            pl.BlockSpec((G, 1), lambda b, t: (0, 0)),
            pl.BlockSpec((1, Ch, Cin), lambda b, t: (t, 0, 0)),
            pl.BlockSpec((1, Ch, 1), lambda b, t: (t, 0, 0)),
            pl.BlockSpec((1, 1, Cx, P), lambda b, t: (b, t, 0, 0)),
            pl.BlockSpec((1, 1, Cin, P), lambda b, t: (b, K - 1, 0, 0)),
        ],
        out_specs=pl.BlockSpec((1, 1, Ch, P), lambda b, t: (b, t, 0, 0)),
        scratch_shapes=[pltpu.VMEM((Ch, P), jnp.float32),
                        pltpu.VMEM((Ch, P), jnp.float32)],
        compiler_params=pltpu.CompilerParams(
            dimension_semantics=("parallel", "arbitrary"),
            vmem_limit_bytes=_VMEM_LIMIT),
    )(mask, w_prep, b_prep, w1_k, b1_k, x_seq, x_pad)


def conv1x1_only(x_pad, w1, b1):
    """x_pad: (B,K,Cx,P) -> (B, Cout, P); used when mm_no_residual=True."""
    B, K, Cx, P = x_pad.shape
    Cout = w1.shape[0]
    return pl.pallas_call(
        _conv1x1_kernel,
        out_shape=jax.ShapeDtypeStruct((B, Cout, P), x_pad.dtype),
        grid=(B,),
        in_specs=[
            pl.BlockSpec((Cout, Cx), lambda b: (0, 0)),
            pl.BlockSpec((Cout, 1), lambda b: (0, 0)),
            pl.BlockSpec((1, 1, Cx, P), lambda b: (b, K - 1, 0, 0)),
        ],
        out_specs=pl.BlockSpec((1, Cout, P), lambda b: (b, 0, 0)),
        compiler_params=pltpu.CompilerParams(
            dimension_semantics=("parallel",),
            vmem_limit_bytes=_VMEM_LIMIT),
    )(w1, b1, x_pad)


# ---------------------------------------------------------------------------
# AeDet forward (inference branch of the PyTorch module)
# ---------------------------------------------------------------------------
def make_interior_mask(height, width, p_pad):
    m = jnp.pad(jnp.ones((height, width), jnp.float32), ((1, 1), (1, 1)))
    m = m.reshape(1, (height + 2) * (width + 2))
    return jnp.pad(m, ((0, 0), (0, p_pad - m.shape[1])))


def aedet_forward(x_nchw, mats_dict, params, *, channels, num_keys, num_layers,
                  height, width, mm_no_residual=False):
    del mats_dict  # only consumed by the (omitted) LSSFPN backbone
    B = x_nchw.shape[0]
    C, K, H, W = channels, num_keys, height, width
    P = (H + 2) * (W + 2)
    P_pad = _round_up(P, 128)  # lane-dense: last dim a multiple of 128

    # (B, C*K, H, W) -> (B, K, C, P_pad): split keys, one-time zero pad for the
    # 3x3 convs, flatten pixels onto the lane axis.  Channels stay on sublanes,
    # so no NCHW<->NHWC transpose is ever materialized.
    x = x_nchw.reshape(B, K, C, H, W)
    x_pad = jnp.pad(x, ((0, 0), (0, 0), (0, 0), (1, 1), (1, 1)))
    x_pad = x_pad.reshape(B, K, C, P)
    x_pad = jnp.pad(x_pad, ((0, 0), (0, 0), (0, 0), (0, P_pad - P)))

    if mm_no_residual:
        # Residual is unused -> skip the ConvLSTM entirely.
        out_pad = conv1x1_only(x_pad, params["conv_w"], params["conv_b"])
    else:
        mask = make_interior_mask(H, W, P_pad)
        seq = x_pad
        for layer in range(num_layers - 1):
            seq = convlstm_layer(seq, params["lstm_w"][layer],
                                 params["lstm_b"][layer], mask, width=W)
        # Final ConvLSTM layer fused with conv1by1 + residual: the last-layer
        # hidden stack never round-trips to HBM.
        out4 = convlstm_last_layer_fused(
            seq, x_pad, params["lstm_w"][num_layers - 1],
            params["lstm_b"][num_layers - 1], params["conv_w_k"],
            params["conv_b_k"], mask, width=W)
        out_pad = out4.reshape(B, C * K, P_pad)
    # TODO(synk): nn.Dropout(0.1) is identity in eval mode.

    out = out_pad[:, :, :P].reshape(B, C * K, H + 2, W + 2)[:, :, 1:H + 1,
                                                            1:W + 1]
    # TODO(synk): AeDetHead not available; return head input as the prediction.
    return out


# ---------------------------------------------------------------------------
# Parameters: PyTorch layouts + repacking into the kernels' layout
# ---------------------------------------------------------------------------
def init_params(key, channels, num_keys, num_layers, dtype=jnp.float32):
    """Parameters in the PyTorch module's native layouts (OIHW conv weights)."""
    C = channels
    p = {"lstm_w": [], "lstm_b": []}
    for _ in range(num_layers):
        key, k1, k2 = jax.random.split(key, 3)
        p["lstm_w"].append(0.1 * jax.random.normal(k1, (4 * C, 2 * C, 3, 3),
                                                   dtype))
        p["lstm_b"].append(0.01 * jax.random.normal(k2, (4 * C,), dtype))
    key, k1, k2 = jax.random.split(key, 3)
    p["conv_w"] = 0.1 * jax.random.normal(k1, (C * num_keys, C, 1, 1), dtype)
    p["conv_b"] = 0.01 * jax.random.normal(k2, (C * num_keys,), dtype)
    return p


def prepare_params(torch_params, channels):
    """Repack PyTorch weights into the kernels' MXU-friendly layout."""
    Cx = channels
    out = {"lstm_w": [], "lstm_b": []}
    for wt, bt in zip(torch_params["lstm_w"], torch_params["lstm_b"]):
        G = wt.shape[0]                 # 4*Ch
        Ch = G // 4                     # input channel order in wt is [x, h]
        w_x = jnp.transpose(wt[:, :Cx], (2, 0, 3, 1)).reshape(3, G, 3 * Cx)
        w_h = jnp.transpose(wt[:, Cx:], (2, 0, 3, 1)).reshape(3, G, 3 * Ch)
        out["lstm_w"].append(
            jnp.concatenate([w_x, w_h], axis=-1).reshape(3 * G, 3 * (Cx + Ch)))
        out["lstm_b"].append(bt.reshape(G, 1))
    w1 = torch_params["conv_w"][:, :, 0, 0]         # (Cout, Cx)
    b1 = torch_params["conv_b"]                     # (Cout,)
    Cout = w1.shape[0]
    K = Cout // channels
    out["conv_w"] = w1
    out["conv_b"] = b1.reshape(-1, 1)
    # Per-key slices for the fused last-layer kernel (block-index along keys).
    out["conv_w_k"] = w1.reshape(K, channels, Cx)
    out["conv_b_k"] = b1.reshape(K, channels, 1)
    return out


# ---------------------------------------------------------------------------
# Pure-JAX reference (mirrors the PyTorch code) for a correctness check
# ---------------------------------------------------------------------------
def _convlstm_ref(x_seq, wt, bt):
    """ConvLSTM layer (gate order i, f, o, g), zero-init states, batch_first."""
    B, T, _, H, W = x_seq.shape
    Ch = wt.shape[0] // 4
    h = jnp.zeros((B, Ch, H, W), x_seq.dtype)
    c = jnp.zeros_like(h)
    outs = []
    for t in range(T):
        conv = jax.lax.conv_general_dilated(
            jnp.concatenate([x_seq[:, t], h], axis=1), wt,
            window_strides=(1, 1), padding=((1, 1), (1, 1)),
            dimension_numbers=("NCHW", "OIHW", "NCHW"))
        conv = conv + bt[None, :, None, None]
        i_g, f_g, o_g, g_g = jnp.split(conv, 4, axis=1)
        c = jax.nn.sigmoid(f_g) * c + jax.nn.sigmoid(i_g) * jnp.tanh(g_g)
        h = jax.nn.sigmoid(o_g) * jnp.tanh(c)
        outs.append(h)
    return jnp.stack(outs, axis=1)


def aedet_forward_ref(x_nchw, torch_params, *, channels, num_keys, num_layers,
                      height, width, mm_no_residual=False):
    B = x_nchw.shape[0]
    C, K, H, W = channels, num_keys, height, width
    x = x_nchw.reshape(B, K, C, H, W)
    w1 = torch_params["conv_w"][:, :, 0, 0]
    y = (jnp.einsum("oc,bchw->bohw", w1, x[:, K - 1])
         + torch_params["conv_b"][None, :, None, None])
    if mm_no_residual:
        return y
    seq = x
    for layer in range(num_layers):
        seq = _convlstm_ref(seq, torch_params["lstm_w"][layer],
                            torch_params["lstm_b"][layer])
    res = seq.reshape(B, C * K, H, W)
    return y + res


if __name__ == "__main__":
    backbone_conf = dict(
        output_channels=4,
        num_keys=2,
        convlstm_layer=1,
        mm_no_residual=False,
        deform_conv_lstm=False,
        motion_gate=False,
        bevdepth=False,
        x_bound=[-8.0, 8.0, 1.0],
        y_bound=[-8.0, 8.0, 1.0],
    )
    B = 2
    C = backbone_conf["output_channels"]
    K = backbone_conf["num_keys"]
    height = int((backbone_conf["x_bound"][1] - backbone_conf["x_bound"][0])
                 / backbone_conf["x_bound"][2])
    width = int((backbone_conf["y_bound"][1] - backbone_conf["y_bound"][0])
                / backbone_conf["y_bound"][2])

    key = jax.random.PRNGKey(0)
    key, kx = jax.random.split(key)
    # Backbone (LSSFPN) output stand-in: (B, C*num_keys, H, W) in NCHW.
    x = jax.random.normal(kx, (B, C * K, height, width), jnp.float32)
    mats_dict = {}  # unused: consumed only by the omitted backbone

    # (num_layers, mm_no_residual) configurations: exercise the fused
    # last-layer kernel, the plain layer kernel, and the conv1x1-only path.
    for num_layers, no_res in [(1, False), (2, False), (1, True)]:
        key, kp = jax.random.split(key)
        torch_params = init_params(kp, C, K, num_layers)
        kernel_params = prepare_params(torch_params, C)

        fwd = jax.jit(functools.partial(
            aedet_forward,
            channels=C, num_keys=K, num_layers=num_layers,
            height=height, width=width, mm_no_residual=no_res))
        preds = fwd(x, mats_dict, kernel_params)
        jax.block_until_ready(preds)
        assert preds.shape == (B, C * K, height, width)

        ref = aedet_forward_ref(
            x, torch_params,
            channels=C, num_keys=K, num_layers=num_layers,
            height=height, width=width, mm_no_residual=no_res)
        np.testing.assert_allclose(np.asarray(preds), np.asarray(ref),
                                   rtol=2e-2, atol=2e-2)
    print("KERNEL_OK")
</pallas_src>

<mosaic_0001>
module attributes {stable_mosaic.version = 11 : i64} {
  func.func @_convlstm_last_fused_kernel(%arg0: i32, %arg1: i32, %arg2: memref<1x384xf32, #tpu.memory_space<vmem>>, %arg3: memref<48x24xf32, #tpu.memory_space<vmem>>, %arg4: memref<16x1xf32, #tpu.memory_space<vmem>>, %arg5: memref<1x4x4xf32, #tpu.memory_space<vmem>>, %arg6: memref<1x4x1xf32, #tpu.memory_space<vmem>>, %arg7: memref<1x1x4x384xf32, #tpu.memory_space<vmem>>, %arg8: memref<1x1x4x384xf32, #tpu.memory_space<vmem>>, %arg9: memref<1x1x4x384xf32, #tpu.memory_space<vmem>>, %arg10: memref<4x384xf32, #tpu.memory_space<vmem>>, %arg11: memref<4x384xf32, #tpu.memory_space<vmem>>) attributes {dimension_semantics = [#tpu.dimension_semantics<parallel>, #tpu.dimension_semantics<arbitrary>], iteration_bounds = array<i64: 2, 2>, scalar_prefetch = 0 : i64, scratch_operands = 2 : i64, tpu.core_type = #tpu.core_type<tc>, window_params = [{pipeline_mode = #tpu.pipeline_mode<synchronous>, transform_indices = @transform_0, window_bounds = array<i64: 1, 384>}, {pipeline_mode = #tpu.pipeline_mode<synchronous>, transform_indices = @transform_1, window_bounds = array<i64: 48, 24>}, {pipeline_mode = #tpu.pipeline_mode<synchronous>, transform_indices = @transform_2, window_bounds = array<i64: 16, 1>}, {transform_indices = @transform_3, window_bounds = array<i64: 1, 4, 4>}, {transform_indices = @transform_4, window_bounds = array<i64: 1, 4, 1>}, {transform_indices = @transform_5, window_bounds = array<i64: 1, 1, 4, 384>}, {transform_indices = @transform_6, window_bounds = array<i64: 1, 1, 4, 384>}, {transform_indices = @transform_7, window_bounds = array<i64: 1, 1, 4, 384>}]} {
    %c0_i32 = arith.constant 0 : i32
    %0 = arith.cmpi eq, %arg1, %c0_i32 : i32
    %1 = arith.extui %0 : i1 to i32
    %c0_i32_0 = arith.constant 0 : i32
    %2 = arith.cmpi ne, %1, %c0_i32_0 : i32
    scf.if %2 {
      %cst_38 = arith.constant 0.000000e+00 : f32
      %71 = vector.broadcast %cst_38 : f32 to vector<4x384xf32>
      %c0_39 = arith.constant 0 : index
      %c0_40 = arith.constant 0 : index
      %72 = vector.load %arg10[%c0_39, %c0_40] : memref<4x384xf32, #tpu.memory_space<vmem>>, vector<4x384xf32>
      tpu.vector_store %arg10[%c0_39, %c0_40], %71 {strides = array<i32>} : memref<4x384xf32, #tpu.memory_space<vmem>>, vector<4x384xf32>,
      %cst_41 = arith.constant 0.000000e+00 : f32
      %73 = vector.broadcast %cst_41 : f32 to vector<4x384xf32>
      %c0_42 = arith.constant 0 : index
      %c0_43 = arith.constant 0 : index
      %74 = vector.load %arg11[%c0_42, %c0_43] : memref<4x384xf32, #tpu.memory_space<vmem>>, vector<4x384xf32>
      tpu.vector_store %arg11[%c0_42, %c0_43], %73 {strides = array<i32>} : memref<4x384xf32, #tpu.memory_space<vmem>>, vector<4x384xf32>,
    } else {
    }
    %c0 = arith.constant 0 : index
    %c0_1 = arith.constant 0 : index
    %3 = vector.load %arg2[%c0, %c0_1] : memref<1x384xf32, #tpu.memory_space<vmem>>, vector<1x384xf32>
    %c0_2 = arith.constant 0 : index
    %c0_3 = arith.constant 0 : index
    %4 = vector.load %arg3[%c0_2, %c0_3] : memref<48x24xf32, #tpu.memory_space<vmem>>, vector<48x24xf32>
    %c0_4 = arith.constant 0 : index
    %c0_5 = arith.constant 0 : index
    %5 = vector.load %arg4[%c0_4, %c0_5] : memref<16x1xf32, #tpu.memory_space<vmem>>, vector<16x1xf32>
    %c0_6 = arith.constant 0 : index
    %c0_7 = arith.constant 0 : index
    %c0_8 = arith.constant 0 : index
    %c0_9 = arith.constant 0 : index
    %6 = vector.load %arg7[%c0_6, %c0_7, %c0_8, %c0_9] : memref<1x1x4x384xf32, #tpu.memory_space<vmem>>, vector<1x1x4x384xf32>
    %7 = vector.shape_cast %6 : vector<1x1x4x384xf32> to vector<4x384xf32>
    %c0_10 = arith.constant 0 : index
    %c0_11 = arith.constant 0 : index
    %8 = vector.load %arg10[%c0_10, %c0_11] : memref<4x384xf32, #tpu.memory_space<vmem>>, vector<4x384xf32>
    %c0_12 = arith.constant 0 : index
    %c0_13 = arith.constant 0 : index
    %9 = vector.load %arg11[%c0_12, %c0_13] : memref<4x384xf32, #tpu.memory_space<vmem>>, vector<4x384xf32>
    %c1_i32 = arith.constant 1 : i32
    %10 = tpu.dynamic_rotate %7 by %c1_i32 dim 1 : vector<4x384xf32>, i32 -> vector<4x384xf32>
    %c383_i32 = arith.constant 383 : i32
    %11 = tpu.dynamic_rotate %7 by %c383_i32 dim 1 : vector<4x384xf32>, i32 -> vector<4x384xf32>
    %12 = tpu.concatenate %10, %7, %11 in 0 : vector<4x384xf32>, vector<4x384xf32>, vector<4x384xf32> -> vector<12x384xf32>
    %c1_i32_14 = arith.constant 1 : i32
    %13 = tpu.dynamic_rotate %8 by %c1_i32_14 dim 1 : vector<4x384xf32>, i32 -> vector<4x384xf32>
    %c383_i32_15 = arith.constant 383 : i32
    %14 = tpu.dynamic_rotate %8 by %c383_i32_15 dim 1 : vector<4x384xf32>, i32 -> vector<4x384xf32>
    %15 = tpu.concatenate %13, %8, %14 in 0 : vector<4x384xf32>, vector<4x384xf32>, vector<4x384xf32> -> vector<12x384xf32>
    %16 = tpu.concatenate %12, %15 in 0 : vector<12x384xf32>, vector<12x384xf32> -> vector<24x384xf32>
    %cst = arith.constant dense<0.000000e+00> : vector<48x384xf32>
    %17 = tpu.matmul %4, %16, %cst {dimension_numbers = #tpu.dot_dimension_numbers<[1], [0], [0], [1], [0, 0, 1, 1], [], []>} : vector<48x24xf32>, vector<24x384xf32>, vector<48x384xf32> -> vector<48x384xf32>
    %18 = vector.extract_strided_slice %17 {offsets = [0, 0], sizes = [16, 384], strides = [1, 1]} : vector<48x384xf32> to vector<16x384xf32>
    %c18_i32 = arith.constant 18 : i32
    %19 = tpu.dynamic_rotate %18 by %c18_i32 dim 1 : vector<16x384xf32>, i32 -> vector<16x384xf32>
    %20 = vector.broadcast %5 : vector<16x1xf32> to vector<16x384xf32>
    %21 = arith.addf %20, %19 : vector<16x384xf32>
    %22 = vector.extract_strided_slice %17 {offsets = [16, 0], sizes = [16, 384], strides = [1, 1]} : vector<48x384xf32> to vector<16x384xf32>
    %23 = arith.addf %21, %22 : vector<16x384xf32>
    %24 = vector.extract_strided_slice %17 {offsets = [32, 0], sizes = [16, 384], strides = [1, 1]} : vector<48x384xf32> to vector<16x384xf32>
    %c366_i32 = arith.constant 366 : i32
    %25 = tpu.dynamic_rotate %24 by %c366_i32 dim 1 : vector<16x384xf32>, i32 -> vector<16x384xf32>
    %26 = arith.addf %23, %25 : vector<16x384xf32>
    %27 = vector.extract_strided_slice %26 {offsets = [0, 0], sizes = [4, 384], strides = [1, 1]} : vector<16x384xf32> to vector<4x384xf32>
    %28 = arith.negf %27 : vector<4x384xf32>
    %29 = math.exp %28 : vector<4x384xf32>
    %cst_16 = arith.constant 1.000000e+00 : f32
    %30 = vector.broadcast %cst_16 : f32 to vector<4x384xf32>
    %31 = arith.addf %30, %29 : vector<4x384xf32>
    %32 = arith.divf %30, %31 : vector<4x384xf32>
    %33 = vector.extract_strided_slice %26 {offsets = [4, 0], sizes = [4, 384], strides = [1, 1]} : vector<16x384xf32> to vector<4x384xf32>
    %34 = arith.negf %33 : vector<4x384xf32>
    %35 = math.exp %34 : vector<4x384xf32>
    %cst_17 = arith.constant 1.000000e+00 : f32
    %36 = vector.broadcast %cst_17 : f32 to vector<4x384xf32>
    %37 = arith.addf %36, %35 : vector<4x384xf32>
    %38 = arith.divf %36, %37 : vector<4x384xf32>
    %39 = vector.extract_strided_slice %26 {offsets = [8, 0], sizes = [4, 384], strides = [1, 1]} : vector<16x384xf32> to vector<4x384xf32>
    %40 = arith.negf %39 : vector<4x384xf32>
    %41 = math.exp %40 : vector<4x384xf32>
    %cst_18 = arith.constant 1.000000e+00 : f32
    %42 = vector.broadcast %cst_18 : f32 to vector<4x384xf32>
    %43 = arith.addf %42, %41 : vector<4x384xf32>
    %44 = arith.divf %42, %43 : vector<4x384xf32>
    %45 = vector.extract_strided_slice %26 {offsets = [12, 0], sizes = [4, 384], strides = [1, 1]} : vector<16x384xf32> to vector<4x384xf32>
    %46 = math.tanh %45 : vector<4x384xf32>
    %47 = arith.mulf %38, %9 : vector<4x384xf32>
    %48 = arith.mulf %32, %46 : vector<4x384xf32>
    %49 = arith.addf %47, %48 : vector<4x384xf32>
    %50 = vector.broadcast %3 : vector<1x384xf32> to vector<4x384xf32>
    %51 = arith.mulf %49, %50 : vector<4x384xf32>
    %52 = math.tanh %51 : vector<4x384xf32>
    %53 = arith.mulf %44, %52 : vector<4x384xf32>
    %54 = vector.broadcast %3 : vector<1x384xf32> to vector<4x384xf32>
    %55 = arith.mulf %53, %54 : vector<4x384xf32>
    %c0_19 = arith.constant 0 : index
    %c0_20 = arith.constant 0 : index
    %56 = vector.load %arg10[%c0_19, %c0_20] : memref<4x384xf32, #tpu.memory_space<vmem>>, vector<4x384xf32>
    tpu.vector_store %arg10[%c0_19, %c0_20], %55 {strides = array<i32>} : memref<4x384xf32, #tpu.memory_space<vmem>>, vector<4x384xf32>,
    %c0_21 = arith.constant 0 : index
    %c0_22 = arith.constant 0 : index
    %57 = vector.load %arg11[%c0_21, %c0_22] : memref<4x384xf32, #tpu.memory_space<vmem>>, vector<4x384xf32>
    tpu.vector_store %arg11[%c0_21, %c0_22], %51 {strides = array<i32>} : memref<4x384xf32, #tpu.memory_space<vmem>>, vector<4x384xf32>,
    %c0_23 = arith.constant 0 : index
    %c0_24 = arith.constant 0 : index
    %c0_25 = arith.constant 0 : index
    %58 = vector.load %arg5[%c0_23, %c0_24, %c0_25] : memref<1x4x4xf32, #tpu.memory_space<vmem>>, vector<1x4x4xf32>
    %59 = vector.shape_cast %58 : vector<1x4x4xf32> to vector<4x4xf32>
    %c0_26 = arith.constant 0 : index
    %c0_27 = arith.constant 0 : index
    %c0_28 = arith.constant 0 : index
    %c0_29 = arith.constant 0 : index
    %60 = vector.load %arg8[%c0_26, %c0_27, %c0_28, %c0_29] : memref<1x1x4x384xf32, #tpu.memory_space<vmem>>, vector<1x1x4x384xf32>
    %61 = vector.shape_cast %60 : vector<1x1x4x384xf32> to vector<4x384xf32>
    %cst_30 = arith.constant dense<0.000000e+00> : vector<4x384xf32>
    %62 = tpu.matmul %59, %61, %cst_30 {dimension_numbers = #tpu.dot_dimension_numbers<[1], [0], [0], [1], [0, 0, 1, 1], [], []>} : vector<4x4xf32>, vector<4x384xf32>, vector<4x384xf32> -> vector<4x384xf32>
    %c0_31 = arith.constant 0 : index
    %c0_32 = arith.constant 0 : index
    %c0_33 = arith.constant 0 : index
    %63 = vector.load %arg6[%c0_31, %c0_32, %c0_33] : memref<1x4x1xf32, #tpu.memory_space<vmem>>, vector<1x4x1xf32>
    %64 = vector.shape_cast %63 : vector<1x4x1xf32> to vector<4x1xf32>
    %65 = vector.broadcast %64 : vector<4x1xf32> to vector<4x384xf32>
    %66 = arith.addf %62, %65 : vector<4x384xf32>
    %67 = arith.addf %66, %55 : vector<4x384xf32>
    %c0_34 = arith.constant 0 : index
    %c0_35 = arith.constant 0 : index
    %c0_36 = arith.constant 0 : index
    %c0_37 = arith.constant 0 : index
    %68 = vector.load %arg9[%c0_34, %c0_35, %c0_36, %c0_37] : memref<1x1x4x384xf32, #tpu.memory_space<vmem>>, vector<1x1x4x384xf32>
    %69 = vector.shape_cast %68 : vector<1x1x4x384xf32> to vector<4x384xf32>
    %70 = vector.shape_cast %67 : vector<4x384xf32> to vector<1x1x4x384xf32>
    tpu.vector_store %arg9[%c0_34, %c0_35, %c0_36, %c0_37], %70 {strides = array<i32>} : memref<1x1x4x384xf32, #tpu.memory_space<vmem>>, vector<1x1x4x384xf32>,
    return
  }
  func.func @transform_0(%arg0: i32, %arg1: i32) -> (i32, i32) {
    %c0_i32 = arith.constant 0 : i32
    %c0_i32_0 = arith.constant 0 : i32
    %c0_i32_1 = arith.constant 0 : i32
    return %c0_i32, %c0_i32_0 : i32, i32
  }
  func.func @transform_1(%arg0: i32, %arg1: i32) -> (i32, i32) {
    %c0_i32 = arith.constant 0 : i32
    %c0_i32_0 = arith.constant 0 : i32
    %c0_i32_1 = arith.constant 0 : i32
    return %c0_i32, %c0_i32_0 : i32, i32
  }
  func.func @transform_2(%arg0: i32, %arg1: i32) -> (i32, i32) {
    %c0_i32 = arith.constant 0 : i32
    %c0_i32_0 = arith.constant 0 : i32
    %c0_i32_1 = arith.constant 0 : i32
    return %c0_i32, %c0_i32_0 : i32, i32
  }
  func.func @transform_3(%arg0: i32, %arg1: i32) -> (i32, i32, i32) {
    %c0_i32 = arith.constant 0 : i32
    %c0_i32_0 = arith.constant 0 : i32
    %c0_i32_1 = arith.constant 0 : i32
    return %arg1, %c0_i32, %c0_i32_0 : i32, i32, i32
  }
  func.func @transform_4(%arg0: i32, %arg1: i32) -> (i32, i32, i32) {
    %c0_i32 = arith.constant 0 : i32
    %c0_i32_0 = arith.constant 0 : i32
    %c0_i32_1 = arith.constant 0 : i32
    return %arg1, %c0_i32, %c0_i32_0 : i32, i32, i32
  }
  func.func @transform_5(%arg0: i32, %arg1: i32) -> (i32, i32, i32, i32) {
    %c0_i32 = arith.constant 0 : i32
    %c0_i32_0 = arith.constant 0 : i32
    %c0_i32_1 = arith.constant 0 : i32
    return %arg0, %arg1, %c0_i32, %c0_i32_0 : i32, i32, i32, i32
  }
  func.func @transform_6(%arg0: i32, %arg1: i32) -> (i32, i32, i32, i32) {
    %c1_i32 = arith.constant 1 : i32
    %c0_i32 = arith.constant 0 : i32
    %c0_i32_0 = arith.constant 0 : i32
    %c0_i32_1 = arith.constant 0 : i32
    return %arg0, %c1_i32, %c0_i32, %c0_i32_0 : i32, i32, i32, i32
  }
  func.func @transform_7(%arg0: i32, %arg1: i32) -> (i32, i32, i32, i32) {
    %c0_i32 = arith.constant 0 : i32
    %c0_i32_0 = arith.constant 0 : i32
    %c0_i32_1 = arith.constant 0 : i32
    return %arg0, %arg1, %c0_i32, %c0_i32_0 : i32, i32, i32, i32
  }
}

</mosaic_0001>

<llo_original>
// kernel: aedet_forward.1
$region0: #{aedet_forward.1}
  #allocation0 [shape = 'u32[]', space=smem, size = 0x4, offset = 0x4, fixed_abs, tag = 'smem constant byte address 0x4 - core index']
  #allocation1 [shape = 'u32[144,128]{1,0:T(1,128)}', space=vmem, size = 0x12000, scoped, tag = 'internal scratch']
  #allocation2 [shape = 'f32[4,384]{1,0:T(4,128)}', space=vmem, size = 0x1800, scoped, tag = 'scratch operand']
  #allocation3 [shape = 'f32[4,384]{1,0:T(4,128)}', space=vmem, size = 0x1800, scoped, tag = 'scratch operand']
  %s0 = inlined_call_operand.vmem [shape: f32[1,384], index: 0, kind: input, shape index: {}]
  %s1 = inlined_call_operand.vmem [shape: f32[48,24], index: 1, kind: input, shape index: {}]
  %s2 = inlined_call_operand.vmem [shape: f32[16,1], index: 2, kind: input, shape index: {}]
  %s3 = inlined_call_operand.vmem [shape: f32[2,4,4], index: 3, kind: input, shape index: {}]
  %s4 = inlined_call_operand.vmem [shape: f32[2,4,1], index: 4, kind: input, shape index: {}]
  %s5 = inlined_call_operand.vmem [shape: f32[2,2,4,384], index: 5, kind: input, shape index: {}, may-alias: {5,6}]
  %s6 = inlined_call_operand.vmem [shape: f32[2,2,4,384], index: 6, kind: input, shape index: {}, may-alias: {5,6}]
  %s7 = inlined_call_operand.vmem [shape: f32[2,2,4,384], index: 7, kind: output, shape index: {}]
  %s8 = sld [smem:[#allocation0]]
  $region65: #{aedet_forward.1} parent=0
    _
  %s10 = ssub.s32 1, %s8
  %s11 = scalar_select 0, %s10, %s8
  loop: start=0, step=1, limit=6
  $region2: #{aedet_forward.1} parent=0 // loop_pre_header
    _
  $region3: #{aedet_forward.1} parent=0 // loop_header
    %s13 = sphi 0, %s17
    %p14 = scmp.ge.s32.totalorder %s13, 6
    %s20 = sphi 0, %s32
    %s21 = sphi 0, %s28
    %s22 = sphi 0, %s20
    %s23 = sphi 0, %s21
    %s24 = sphi 0, %s22
    %s25 = sphi 0, %s23
    %s33 = sphi 0, %s33
    %s35 = sphi 0, %s33
    %s36 = sphi 0, %s35
    %s50 = sphi 0, %s36
    %s54 = sphi 0, %s54
    %s56 = sphi 0, %s54
    %s57 = sphi 0, %s56
    %s71 = sphi 0, %s57
    %s75 = sphi 0, %s75
    %s77 = sphi 0, %s75
    %s78 = sphi 0, %s77
    %s92 = sphi 0, %s78
    %s98 = sphi 0, %s100
    %s101 = sphi 0, %s98
    %s102 = sphi 0, %s101
    %s118 = sphi 0, %s102
    %s124 = sphi 0, %s126
    %s127 = sphi 0, %s124
    %s128 = sphi 0, %s127
    %s144 = sphi 0, %s128
    %s152 = sphi 0, %s154
    %s155 = sphi 0, %s152
    %s156 = sphi 0, %s155
    %s172 = sphi 0, %s156
    %s178 = sphi 0, %s180
    %s181 = sphi 0, %s178
    %s182 = sphi 0, %s181
    %s198 = sphi 0, %s182
    %s206 = sphi 0, %s208
    %s209 = sphi 0, %s206
    %s210 = sphi 0, %s209
    %s226 = sphi 0, %s210
  $region4: #{aedet_forward.1} parent=0 // loop_header_branch
    %16 = sbr.rel (%p14) target = $region8
  $region5: #{aedet_forward.1} parent=0 // loop_body
    %s18 = ssub.s32 %s13, 1
    %s19 = ssub.s32 %s13, 2
    %s26 = sadd.s32 1, %s21
    %p27 = scmp.ge.s32.totalorder %s26, 2
    %s28 = scalar_select %p27, 0, %s26
    %s29 = sadd.s32 1, %s20
    %s30 = scalar_select %p27, %s29, %s20
    %p31 = scmp.ge.s32.totalorder %s30, 2
    %s32 = scalar_select %p31, 0, %s30
    %s34 = sadd.s32 %s33, 1
    %p37 = scmp.eq.s32.totalorder %s13, 3
    %p38 = scmp.ne.s32.totalorder %s33, %s35
    %p39 = scmp.eq.s32.totalorder %s13, 0
    %p40 = por %p38, %p39
    %p41 = scmp.ne.s32.totalorder %s33, %s35
    %p42 = scmp.eq.s32.totalorder %s18, 3
    %p43 = por %p41, %p42
    %p44 = scmp.ne.s32.totalorder %s35, %s36
    %p45 = scmp.eq.s32.totalorder %s18, 0
    %p46 = por %p44, %p45
    %p47 = scmp.ne.s32.totalorder %s35, %s36
    %p48 = scmp.eq.s32.totalorder %s19, 3
    %p49 = por %p47, %p48
    %p51 = scmp.ne.s32.totalorder %s36, %s50
    %p52 = scmp.eq.s32.totalorder %s19, 0
    %p53 = por %p51, %p52
    %s55 = sadd.s32 %s54, 1
    %p58 = scmp.eq.s32.totalorder %s13, 3
    %p59 = scmp.ne.s32.totalorder %s54, %s56
    %p60 = scmp.eq.s32.totalorder %s13, 0
    %p61 = por %p59, %p60
    %p62 = scmp.ne.s32.totalorder %s54, %s56
    %p63 = scmp.eq.s32.totalorder %s18, 3
    %p64 = por %p62, %p63
    %p65 = scmp.ne.s32.totalorder %s56, %s57
    %p66 = scmp.eq.s32.totalorder %s18, 0
    %p67 = por %p65, %p66
    %p68 = scmp.ne.s32.totalorder %s56, %s57
    %p69 = scmp.eq.s32.totalorder %s19, 3
    %p70 = por %p68, %p69
    %p72 = scmp.ne.s32.totalorder %s57, %s71
    %p73 = scmp.eq.s32.totalorder %s19, 0
    %p74 = por %p72, %p73
    %s76 = sadd.s32 %s75, 1
    %p79 = scmp.eq.s32.totalorder %s13, 3
    %p80 = scmp.ne.s32.totalorder %s75, %s77
    %p81 = scmp.eq.s32.totalorder %s13, 0
    %p82 = por %p80, %p81
    %p83 = scmp.ne.s32.totalorder %s75, %s77
    %p84 = scmp.eq.s32.totalorder %s18, 3
    %p85 = por %p83, %p84
    %p86 = scmp.ne.s32.totalorder %s77, %s78
    %p87 = scmp.eq.s32.totalorder %s18, 0
    %p88 = por %p86, %p87
    %p89 = scmp.ne.s32.totalorder %s77, %s78
    %p90 = scmp.eq.s32.totalorder %s19, 3
    %p91 = por %p89, %p90
    %p93 = scmp.ne.s32.totalorder %s78, %s92
    %p94 = scmp.eq.s32.totalorder %s19, 0
    %p95 = por %p93, %p94
    %s96 = ssub.s32 %s21, %s28
    %p97 = scmp.eq.s32.totalorder %s96, 0
    %s99 = sadd.s32 %s98, 1
    %s100 = scalar_select %p97, %s98, %s99
    %p103 = pneg %p97
    %p104 = scmp.eq.s32.totalorder %s13, 3
    %p105 = por %p103, %p104
    %p106 = scmp.ne.s32.totalorder %s98, %s101
    %p107 = scmp.eq.s32.totalorder %s13, 0
    %p108 = por %p106, %p107
    %p109 = scmp.ne.s32.totalorder %s98, %s101
    %p110 = scmp.eq.s32.totalorder %s18, 3
    %p111 = por %p109, %p110
    %p112 = scmp.ne.s32.totalorder %s101, %s102
    %p113 = scmp.eq.s32.totalorder %s18, 0
    %p114 = por %p112, %p113
    %p115 = scmp.ne.s32.totalorder %s101, %s102
    %p116 = scmp.eq.s32.totalorder %s19, 3
    %p117 = por %p115, %p116
    %p119 = scmp.ne.s32.totalorder %s102, %s118
    %p120 = scmp.eq.s32.totalorder %s19, 0
    %p121 = por %p119, %p120
    %s122 = ssub.s32 %s21, %s28
    %p123 = scmp.eq.s32.totalorder %s122, 0
    %s125 = sadd.s32 %s124, 1
    %s126 = scalar_select %p123, %s124, %s125
    %p129 = pneg %p123
    %p130 = scmp.eq.s32.totalorder %s13, 3
    %p131 = por %p129, %p130
    %p132 = scmp.ne.s32.totalorder %s124, %s127
    %p133 = scmp.eq.s32.totalorder %s13, 0
    %p134 = por %p132, %p133
    %p135 = scmp.ne.s32.totalorder %s124, %s127
    %p136 = scmp.eq.s32.totalorder %s18, 3
    %p137 = por %p135, %p136
    %p138 = scmp.ne.s32.totalorder %s127, %s128
    %p139 = scmp.eq.s32.totalorder %s18, 0
    %p140 = por %p138, %p139
    %p141 = scmp.ne.s32.totalorder %s127, %s128
    %p142 = scmp.eq.s32.totalorder %s19, 3
    %p143 = por %p141, %p142
    %p145 = scmp.ne.s32.totalorder %s128, %s144
    %p146 = scmp.eq.s32.totalorder %s19, 0
    %p147 = por %p145, %p146
    %s148 = ssub.s32 %s20, %s32
    %s149 = ssub.s32 %s21, %s28
    %s150 = sor.u32 %s148, %s149
    %p151 = scmp.eq.s32.totalorder %s150, 0
    %s153 = sadd.s32 %s152, 1
    %s154 = scalar_select %p151, %s152, %s153
    %p157 = pneg %p151
    %p158 = scmp.eq.s32.totalorder %s13, 3
    %p159 = por %p157, %p158
    %p160 = scmp.ne.s32.totalorder %s152, %s155
    %p161 = scmp.eq.s32.totalorder %s13, 0
    %p162 = por %p160, %p161
    %p163 = scmp.ne.s32.totalorder %s152, %s155
    %p164 = scmp.eq.s32.totalorder %s18, 3
    %p165 = por %p163, %p164
    %p166 = scmp.ne.s32.totalorder %s155, %s156
    %p167 = scmp.eq.s32.totalorder %s18, 0
    %p168 = por %p166, %p167
    %p169 = scmp.ne.s32.totalorder %s155, %s156
    %p170 = scmp.eq.s32.totalorder %s19, 3
    %p171 = por %p169, %p170
    %p173 = scmp.ne.s32.totalorder %s156, %s172
    %p174 = scmp.eq.s32.totalorder %s19, 0
    %p175 = por %p173, %p174
    %s176 = ssub.s32 %s20, %s32
    %p177 = scmp.eq.s32.totalorder %s176, 0
    %s179 = sadd.s32 %s178, 1
    %s180 = scalar_select %p177, %s178, %s179
    %p183 = pneg %p177
    %p184 = scmp.eq.s32.totalorder %s13, 3
    %p185 = por %p183, %p184
    %p186 = scmp.ne.s32.totalorder %s178, %s181
    %p187 = scmp.eq.s32.totalorder %s13, 0
    %p188 = por %p186, %p187
    %p189 = scmp.ne.s32.totalorder %s178, %s181
    %p190 = scmp.eq.s32.totalorder %s18, 3
    %p191 = por %p189, %p190
    %p192 = scmp.ne.s32.totalorder %s181, %s182
    %p193 = scmp.eq.s32.totalorder %s18, 0
    %p194 = por %p192, %p193
    %p195 = scmp.ne.s32.totalorder %s181, %s182
    %p196 = scmp.eq.s32.totalorder %s19, 3
    %p197 = por %p195, %p196
    %p199 = scmp.ne.s32.totalorder %s182, %s198
    %p200 = scmp.eq.s32.totalorder %s19, 0
    %p201 = por %p199, %p200
    %s202 = ssub.s32 %s20, %s32
    %s203 = ssub.s32 %s21, %s28
    %s204 = sor.u32 %s202, %s203
    %p205 = scmp.eq.s32.totalorder %s204, 0
    %s207 = sadd.s32 %s206, 1
    %s208 = scalar_select %p205, %s206, %s207
    %p211 = pneg %p205
    %p212 = scmp.eq.s32.totalorder %s13, 3
    %p213 = por %p211, %p212
    %p214 = scmp.ne.s32.totalorder %s206, %s209
    %p215 = scmp.eq.s32.totalorder %s13, 0
    %p216 = por %p214, %p215
    %p217 = scmp.ne.s32.totalorder %s206, %s209
    %p218 = scmp.eq.s32.totalorder %s18, 3
    %p219 = por %p217, %p218
    %p220 = scmp.ne.s32.totalorder %s209, %s210
    %p221 = scmp.eq.s32.totalorder %s18, 0
    %p222 = por %p220, %p221
    %p223 = scmp.ne.s32.totalorder %s209, %s210
    %p224 = scmp.eq.s32.totalorder %s19, 3
    %p225 = por %p223, %p224
    %p227 = scmp.ne.s32.totalorder %s210, %s226
    %p228 = scmp.eq.s32.totalorder %s19, 0
    %p229 = por %p227, %p228
    %p230 = scmp.le.s32.totalorder 1, %s13
    %p231 = scmp.lt.s32.totalorder %s13, 5
    %p232 = pnand %p230, %p231
    %p233 = pneg %p232
    // Predicated region
    $region9: #{aedet_forward.1} parent=5 // pred_check
      _
    $region10: #{aedet_forward.1} parent=5 // pred_check_branch
      %235 = sbr.rel (%p232) target = $region12
    $region11: #{aedet_forward.1} parent=5 // pred_region
      %s236 = ssub.s32 %s13, 1
      // Predicated region
      $region13: #{aedet_forward.1} parent=11 // pred_check
        %p237 = pneg %p46
      $region14: #{aedet_forward.1} parent=11 // pred_check_branch
        %239 = sbr.rel (%p237) target = $region16
      $region15: #{aedet_forward.1} parent=11 // pred_region
        _
      $region16: #{aedet_forward.1} parent=11 // pred_fallthru
        _
      // Predicated region
      $region17: #{aedet_forward.1} parent=11 // pred_check
        %p240 = pneg %p67
      $region18: #{aedet_forward.1} parent=11 // pred_check_branch
        %242 = sbr.rel (%p240) target = $region20
      $region19: #{aedet_forward.1} parent=11 // pred_region
        _
      $region20: #{aedet_forward.1} parent=11 // pred_fallthru
        _
      // Predicated region
      $region21: #{aedet_forward.1} parent=11 // pred_check
        %p243 = pneg %p88
      $region22: #{aedet_forward.1} parent=11 // pred_check_branch
        %245 = sbr.rel (%p243) target = $region24
      $region23: #{aedet_forward.1} parent=11 // pred_region
        _
      $region24: #{aedet_forward.1} parent=11 // pred_fallthru
        _
    $region12: #{aedet_forward.1} parent=5 // pred_fallthru
      _
    %p246 = scmp.lt.s32.totalorder %s13, 4
    // Predicated region
    $region25: #{aedet_forward.1} parent=5 // pred_check
      %p247 = pneg %p246
    $region26: #{aedet_forward.1} parent=5 // pred_check_branch
      %249 = sbr.rel (%p247) target = $region28
    $region27: #{aedet_forward.1} parent=5 // pred_region
      // Predicated region
      $region29: #{aedet_forward.1} parent=27 // pred_check
        %p250 = pneg %p108
      $region30: #{aedet_forward.1} parent=27 // pred_check_branch
        %252 = sbr.rel (%p250) target = $region32
      $region31: #{aedet_forward.1} parent=27 // pred_region
        %p253 = scmp.lt.s32.totalorder %s21, 1
        %s254 = scalar_select %p253, %s21, 1
        %s255 = smul.addr %s254, 4
        %s256 = scalar_lea.vmem %s3, %s255
      $region32: #{aedet_forward.1} parent=27 // pred_fallthru
        _
      // Predicated region
      $region33: #{aedet_forward.1} parent=27 // pred_check
        %p257 = pneg %p134
      $region34: #{aedet_forward.1} parent=27 // pred_check_branch
        %259 = sbr.rel (%p257) target = $region36
      $region35: #{aedet_forward.1} parent=27 // pred_region
        %p260 = scmp.lt.s32.totalorder %s21, 1
        %s261 = scalar_select %p260, %s21, 1
        %s262 = smul.addr %s261, 4
        %s263 = scalar_lea.vmem %s4, %s262
      $region36: #{aedet_forward.1} parent=27 // pred_fallthru
        _
      // Predicated region
      $region37: #{aedet_forward.1} parent=27 // pred_check
        %p264 = pneg %p162
      $region38: #{aedet_forward.1} parent=27 // pred_check_branch
        %266 = sbr.rel (%p264) target = $region40
      $region39: #{aedet_forward.1} parent=27 // pred_region
        %p267 = scmp.lt.s32.totalorder %s20, 1
        %s268 = scalar_select %p267, %s20, 1
        %p269 = scmp.lt.s32.totalorder %s21, 1
        %s270 = scalar_select %p269, %s21, 1
        %s271 = smul.addr %s270, 3
        %s272 = smul.addr %s268, 6
        %s273 = sadd.s32 %s271, %s272
        %s274 = smul.addr %s273, 4
        %s275 = scalar_lea.vmem %s5, %s274
      $region40: #{aedet_forward.1} parent=27 // pred_fallthru
        _
      // Predicated region
      $region41: #{aedet_forward.1} parent=27 // pred_check
        %p276 = pneg %p188
      $region42: #{aedet_forward.1} parent=27 // pred_check_branch
        %278 = sbr.rel (%p276) target = $region44
      $region43: #{aedet_forward.1} parent=27 // pred_region
        %p279 = scmp.lt.s32.totalorder %s20, 1
        %s280 = scalar_select %p279, %s20, 1
        %s281 = smul.addr %s280, 6
        %s282 = sadd.s32 3, %s281
        %s283 = smul.addr %s282, 4
        %s284 = scalar_lea.vmem %s6, %s283
      $region44: #{aedet_forward.1} parent=27 // pred_fallthru
        _
    $region28: #{aedet_forward.1} parent=5 // pred_fallthru
      _
    %p285 = scmp.le.s32.totalorder 1, %s13
    %p286 = scmp.lt.s32.totalorder %s13, 5
    %p287 = pnand %p285, %p286
    %p288 = pneg %p287
    // Predicated region
    $region45: #{aedet_forward.1} parent=5 // pred_check
      _
    $region46: #{aedet_forward.1} parent=5 // pred_check_branch
      %290 = sbr.rel (%p287) target = $region48
    $region47: #{aedet_forward.1} parent=5 // pred_region
      %s291 = ssub.s32 %s13, 1
      %p292 = pneg %p46
      %p293 = pneg %p43
      %p294 = pneg %p67
      %p295 = pneg %p64
      %p296 = pneg %p88
      %p297 = pneg %p85
      %p298 = scmp.lt.s32.totalorder %s23, 1
      %s299 = scalar_select %p298, %s23, 1
      %s300 = smul.addr %s299, 4
      %s301 = scalar_lea.vmem %s3, %s300
      %p302 = pneg %p114
      %p303 = pneg %p111
      %p304 = scmp.lt.s32.totalorder %s23, 1
      %s305 = scalar_select %p304, %s23, 1
      %s306 = smul.addr %s305, 4
      %s307 = scalar_lea.vmem %s4, %s306
      %p308 = pneg %p140
      %p309 = pneg %p137
      %p310 = scmp.lt.s32.totalorder %s22, 1
      %s311 = scalar_select %p310, %s22, 1
      %p312 = scmp.lt.s32.totalorder %s23, 1
      %s313 = scalar_select %p312, %s23, 1
      %s314 = smul.addr %s313, 3
      %s315 = smul.addr %s311, 6
      %s316 = sadd.s32 %s314, %s315
      %s317 = smul.addr %s316, 4
      %s318 = scalar_lea.vmem %s5, %s317
      %p319 = pneg %p168
      %p320 = pneg %p165
      %p321 = scmp.lt.s32.totalorder %s22, 1
      %s322 = scalar_select %p321, %s22, 1
      %s323 = smul.addr %s322, 6
      %s324 = sadd.s32 3, %s323
      %s325 = smul.addr %s324, 4
      %s326 = scalar_lea.vmem %s6, %s325
      %p327 = pneg %p194
      %p328 = pneg %p191
      %p329 = pneg %p222
      %p330 = pneg %p219
      %p331 = scmp.lt.s32.totalorder %s22, 1
      %s332 = scalar_select %p331, %s22, 1
      %p333 = scmp.lt.s32.totalorder %s23, 1
      %s334 = scalar_select %p333, %s23, 1
      %s335 = smul.addr %s334, 3
      %s336 = smul.addr %s332, 6
      %s337 = sadd.s32 %s335, %s336
      %s338 = smul.addr %s337, 4
      %s339 = scalar_lea.vmem %s7, %s338
      %p340 = scmp.lt.s32.totalorder %s23, 1
      %s341 = scalar_select %p340, %s23, 1
      %s342 = smul.addr %s341, 4
      %s343 = scalar_lea.vmem %s3, %s342
      %p344 = scmp.lt.s32.totalorder %s23, 1
      %s345 = scalar_select %p344, %s23, 1
      %s346 = smul.addr %s345, 4
      %s347 = scalar_lea.vmem %s4, %s346
      %p348 = scmp.lt.s32.totalorder %s22, 1
      %s349 = scalar_select %p348, %s22, 1
      %p350 = scmp.lt.s32.totalorder %s23, 1
      %s351 = scalar_select %p350, %s23, 1
      %s352 = smul.addr %s351, 3
      %s353 = smul.addr %s349, 6
      %s354 = sadd.s32 %s352, %s353
      %s355 = smul.addr %s354, 4
      %s356 = scalar_lea.vmem %s5, %s355
      %p357 = scmp.lt.s32.totalorder %s22, 1
      %s358 = scalar_select %p357, %s22, 1
      %s359 = smul.addr %s358, 6
      %s360 = sadd.s32 3, %s359
      %s361 = smul.addr %s360, 4
      %s362 = scalar_lea.vmem %s6, %s361
      %p363 = scmp.lt.s32.totalorder %s22, 1
      %s364 = scalar_select %p363, %s22, 1
      %p365 = scmp.lt.s32.totalorder %s23, 1
      %s366 = scalar_select %p365, %s23, 1
      %s367 = smul.addr %s366, 3
      %s368 = smul.addr %s364, 6
      %s369 = sadd.s32 %s367, %s368
      %s370 = smul.addr %s369, 4
      %s371 = scalar_lea.vmem %s7, %s370
      %p372 = scmp.eq.s32.totalorder %s23, 0
      // Predicated region
      $region49: #{aedet_forward.1} parent=47 // pred_check
        %p373 = pneg %p372
      $region50: #{aedet_forward.1} parent=47 // pred_check_branch
        %375 = sbr.rel (%p373) target = $region52
      $region51: #{aedet_forward.1} parent=47 // pred_region
        %376 = vst [vmem:[#allocation2] sm:$0xff] 0.0
        %377 = vst [vmem:[#allocation2 + $0x8] sm:$0xf] 0.0
        %378 = vst [vmem:[#allocation3] sm:$0xff] 0.0
        %379 = vst [vmem:[#allocation3 + $0x8] sm:$0xf] 0.0
      $region52: #{aedet_forward.1} parent=47 // pred_fallthru
        _
      %v380 = vld [vmem:[%s0] sm:$0x7]
      %v381 = vld [vmem:[%s1] sm:$0xff]
      %v382 = vld [vmem:[%s1 + $0x8] sm:$0xff]
      %v383 = vld [vmem:[%s1 + $0x10] sm:$0xff]
      %v384 = vld [vmem:[%s1 + $0x18] sm:$0xff]
      %v385 = vld [vmem:[%s1 + $0x20] sm:$0xff]
      %v386 = vld [vmem:[%s1 + $0x28] sm:$0xff]
      %v387 = vld [vmem:[%s2] sm:$0xff]
      %v388 = vld [vmem:[%s2 + $0x8] sm:$0xff]
      %v389 = vld [vmem:[%s356] sm:$0xff]
      %v390 = vld [vmem:[%s356 + $0x8] sm:$0xf]
      %v391 = vld [vmem:[#allocation2] sm:$0xff]
      %v392 = vld [vmem:[#allocation2 + $0x8] sm:$0xf]
      %v393 = vld [vmem:[#allocation3] sm:$0xff]
      %v394 = vld [vmem:[#allocation3 + $0x8] sm:$0xf]
      %v397 = vcombine.high %v389, %v389
      %399 = vrot.lane.b32.xlu0 %v389, 1
      %v400 = vpop.permute.xlu0 %399
      %401 = vrot.lane.b32.xlu0 %v397, 1
      %v402 = vpop.permute.xlu0 %401
      %403 = vrot.lane.b32.xlu0 %v390, 1
      %v404 = vpop.permute.xlu0 %403
      %v405 = vlaneseq
      %v406 = vand.u32 %v405, 127
      %vm407 = vcmp.lt.s32.totalorder %v406, 1
      %v408 = vsel %vm407, %v402, %v404
      %v409 = vsel %vm407, %v400, %v402
      %v410 = vsel %vm407, %v404, %v400
      %411 = vrot.lane.b32.xlu0 %v389, 127
      %v412 = vpop.permute.xlu0 %411
      %413 = vrot.lane.b32.xlu0 %v397, 127
      %v414 = vpop.permute.xlu0 %413
      %415 = vrot.lane.b32.xlu0 %v390, 127
      %v416 = vpop.permute.xlu0 %415
      %vm417 = vcmp.lt.s32.totalorder %v406, 127
      %v418 = vsel %vm417, %v414, %v416
      %v419 = vsel %vm417, %v412, %v414
      %v420 = vsel %vm417, %v416, %v412
      %v421 = vcombine.low %v389, %v389
      %v422 = vcombine.low %v390, %v390
      %vm425 = vcmask 1043456
      %v426 = vsel %vm425, %v410, %v421
      %v427 = vsel %vm425, %v409, %v389
      %v428 = vsel %vm425, %v408, %v422
      %v431 = vcombine.high %v391, %v391
      %433 = vrot.lane.b32.xlu0 %v391, 1
      %v434 = vpop.permute.xlu0 %433
      %435 = vrot.lane.b32.xlu0 %v431, 1
      %v436 = vpop.permute.xlu0 %435
      %437 = vrot.lane.b32.xlu0 %v392, 1
      %v438 = vpop.permute.xlu0 %437
      %v439 = vsel %vm407, %v436, %v438
      %v440 = vsel %vm407, %v434, %v436
      %v441 = vsel %vm407, %v438, %v434
      %442 = vrot.lane.b32.xlu0 %v391, 127
      %v443 = vpop.permute.xlu0 %442
      %444 = vrot.lane.b32.xlu0 %v431, 127
      %v445 = vpop.permute.xlu0 %444
      %446 = vrot.lane.b32.xlu0 %v392, 127
      %v447 = vpop.permute.xlu0 %446
      %v448 = vsel %vm417, %v445, %v447
      %v449 = vsel %vm417, %v443, %v445
      %v450 = vsel %vm417, %v447, %v443
      %v451 = vcombine.low %v391, %v391
      %v452 = vcombine.low %v392, %v392
      %v455 = vsel %vm425, %v441, %v451
      %v456 = vsel %vm425, %v440, %v391
      %v457 = vsel %vm425, %v439, %v452
      %v464 = vrot.slane %v455, 4
      %v465 = vrot.slane %v456, 4
      %v466 = vrot.slane %v457, 4
      %v467 = vrot.slane %v449, 4
      %v468 = vsel %vm425, %v464, %v467
      %v469 = vrot.slane %v448, 4
      %v470 = vsel %vm425, %v465, %v469
      %v471 = vrot.slane %v450, 4
      %v472 = vsel %vm425, %v466, %v471
      %v479 = vsel %vm425, %v419, %v464
      %v480 = vsel %vm425, %v418, %v465
      %v481 = vsel %vm425, %v420, %v466
      %vm482 = vcmask 195584
      %v484 = vsel %vm482, %v381, 0
      %v487 = vsel %vm482, %v382, 0
      %v490 = vsel %vm482, %v383, 0
      %v493 = vsel %vm482, %v384, 0
      %v496 = vsel %vm482, %v385, 0
      %v499 = vsel %vm482, %v386, 0
      %501 = vmatprep.subr.mxu0 %v427
      %502 = vmatpush1.msra.mxu0 %v426
      %503 = vmatprep.subr.mxu0 %v480
      %504 = vmatpush1.msra.mxu0 %v479
      %505 = vmatprep.subr.mxu0 %v470
      %506 = vmatpush1.msra.mxu0 %v468
      %507 = vmatprep.subr.mxu0 0.0
      %508 = vmatpush1.msra.mxu0 0.0
      %509 = vmatprep.subr.mxu0 0.0
      %510 = vmatpush1.msra.mxu0 0.0
      %511 = vmatprep.subr.mxu0 0.0
      %512 = vmatpush1.msra.mxu0 0.0
      %513 = vmatprep.subr.mxu0 0.0
      %514 = vmatpush1.msra.mxu0 0.0
      %515 = vmatprep.subr.mxu0 0.0
      %516 = vmatpush1.msra.mxu0 0.0
      %517 = vmatprep.subr.mxu0 0.0
      %518 = vmatpush1.msra.mxu0 0.0
      %519 = vmatprep.subr.mxu0 0.0
      %520 = vmatpush1.msra.mxu0 0.0
      %521 = vmatprep.subr.mxu0 0.0
      %522 = vmatpush1.msra.mxu0 0.0
      %523 = vmatprep.subr.mxu0 0.0
      %524 = vmatpush1.msra.mxu0 0.0
      %525 = vmatprep.subr.mxu0 0.0
      %526 = vmatpush1.msra.mxu0 0.0
      %527 = vmatprep.subr.mxu0 0.0
      %528 = vmatpush1.msra.mxu0 0.0
      %529 = vmatprep.subr.mxu0 0.0
      %530 = vmatpush1.msra.mxu0 0.0
      %531 = vmatprep.subr.mxu0 0.0
      %532 = vmatpush1.msra.mxu0 0.0
      %533 = vmatprep.subr.mxu0 0.0
      %534 = vmatpush1.msra.mxu0 0.0
      %535 = vmatprep.subr.mxu0 0.0
      %536 = vmatpush1.msra.mxu0 0.0
      %537 = vmatprep.subr.mxu0 0.0
      %538 = vmatpush1.msra.mxu0 0.0
      %539 = vmatprep.subr.mxu0 0.0
      %540 = vmatpush1.msra.mxu0 0.0
      %541 = vmatprep.subr.mxu0 0.0
      %542 = vmatpush1.msra.mxu0 0.0
      %543 = vmatprep.subr.mxu0 0.0
      %544 = vmatpush1.msra.mxu0 0.0
      %545 = vmatprep.subr.mxu0 0.0
      %546 = vmatpush1.msra.mxu0 0.0
      %547 = vmatprep.subr.mxu0 0.0
      %548 = vmatpush1.msra.mxu0 0.0
      %549 = vmatprep.subr.mxu0 0.0
      %550 = vmatpush1.msra.mxu0 0.0
      %551 = vmatprep.subr.mxu0 0.0
      %552 = vmatpush1.msra.mxu0 0.0
      %553 = vmatprep.subr.mxu0 0.0
      %554 = vmatpush1.msra.mxu0 0.0
      %555 = vmatprep.subr.mxu0 0.0
      %556 = vmatpush1.msra.mxu0 0.0
      %557 = vmatprep.subr.mxu0 0.0
      %558 = vmatpush1.msra.mxu0 0.0
      %559 = vmatprep.subr.mxu0 0.0
      %560 = vmatpush1.msra.mxu0 0.0
      %561 = vmatprep.subr.mxu0 0.0
      %562 = vmatpush1.msra.mxu0 0.0
      %563 = vmatprep.subr.mxu0 0.0
      %564 = vmatpush1.msra.mxu0 0.0
      %565 = vmatprep.mubr.f32.mxu0 0.0
      %566 = vmatmul.mubr.f32.gmra.mrb[0].mxu0 %v484
      %v567 = vpop.f32.mrb[0].mxu0
      %v568 = vadd.f32 0.0, %v567
      %v569 = vpop.f32.mrb[0].mxu0
      %v570 = vadd.f32 0.0, %v569
      %571 = vmatprep.mubr.f32.mxu0 0.0
      %572 = vmatmul.mubr.f32.gmra.mrb[0].mxu0 %v487
      %v573 = vpop.f32.mrb[0].mxu0
      %v574 = vadd.f32 0.0, %v573
      %v575 = vpop.f32.mrb[0].mxu0
      %v576 = vadd.f32 0.0, %v575
      %577 = vmatprep.mubr.f32.mxu0 0.0
      %578 = vmatmul.mubr.f32.gmra.mrb[0].mxu0 %v490
      %v579 = vpop.f32.mrb[0].mxu0
      %v580 = vadd.f32 0.0, %v579
      %v581 = vpop.f32.mrb[0].mxu0
      %v582 = vadd.f32 0.0, %v581
      %583 = vmatprep.mubr.f32.mxu0 0.0
      %584 = vmatmul.mubr.f32.gmra.mrb[0].mxu0 %v493
      %v585 = vpop.f32.mrb[0].mxu0
      %v586 = vadd.f32 0.0, %v585
      %v587 = vpop.f32.mrb[0].mxu0
      %v588 = vadd.f32 0.0, %v587
      %589 = vmatprep.mubr.f32.mxu0 0.0
      %590 = vmatmul.mubr.f32.gmra.mrb[0].mxu0 %v496
      %v591 = vpop.f32.mrb[0].mxu0
      %v592 = vadd.f32 0.0, %v591
      %v593 = vpop.f32.mrb[0].mxu0
      %v594 = vadd.f32 0.0, %v593
      %595 = vmatprep.mubr.f32.mxu0 0.0
      %596 = vmatmul.mubr.f32.gmra.mrb[0].mxu0 %v499
      %v597 = vpop.f32.mrb[0].mxu0
      %v598 = vadd.f32 0.0, %v597
      %v599 = vpop.f32.mrb[0].mxu0
      %v600 = vadd.f32 0.0, %v599
      %601 = vdwg.mxu0
      %602 = vmatprep.subr.mxu0 0.0
      %603 = vmatpush1.msra.mxu0 %v428
      %604 = vmatprep.subr.mxu0 0.0
      %605 = vmatpush1.msra.mxu0 %v481
      %606 = vmatprep.subr.mxu0 0.0
      %607 = vmatpush1.msra.mxu0 %v472
      %608 = vmatprep.subr.mxu0 0.0
      %609 = vmatpush1.msra.mxu0 0.0
      %610 = vmatprep.subr.mxu0 0.0
      %611 = vmatpush1.msra.mxu0 0.0
      %612 = vmatprep.subr.mxu0 0.0
      %613 = vmatpush1.msra.mxu0 0.0
      %614 = vmatprep.subr.mxu0 0.0
      %615 = vmatpush1.msra.mxu0 0.0
      %616 = vmatprep.subr.mxu0 0.0
      %617 = vmatpush1.msra.mxu0 0.0
      %618 = vmatprep.subr.mxu0 0.0
      %619 = vmatpush1.msra.mxu0 0.0
      %620 = vmatprep.subr.mxu0 0.0
      %621 = vmatpush1.msra.mxu0 0.0
      %622 = vmatprep.subr.mxu0 0.0
      %623 = vmatpush1.msra.mxu0 0.0
      %624 = vmatprep.subr.mxu0 0.0
      %625 = vmatpush1.msra.mxu0 0.0
      %626 = vmatprep.subr.mxu0 0.0
      %627 = vmatpush1.msra.mxu0 0.0
      %628 = vmatprep.subr.mxu0 0.0
      %629 = vmatpush1.msra.mxu0 0.0
      %630 = vmatprep.subr.mxu0 0.0
      %631 = vmatpush1.msra.mxu0 0.0
      %632 = vmatprep.subr.mxu0 0.0
      %633 = vmatpush1.msra.mxu0 0.0
      %634 = vmatprep.subr.mxu0 0.0
      %635 = vmatpush1.msra.mxu0 0.0
      %636 = vmatprep.subr.mxu0 0.0
      %637 = vmatpush1.msra.mxu0 0.0
      %638 = vmatprep.subr.mxu0 0.0
      %639 = vmatpush1.msra.mxu0 0.0
      %640 = vmatprep.subr.mxu0 0.0
      %641 = vmatpush1.msra.mxu0 0.0
      %642 = vmatprep.subr.mxu0 0.0
      %643 = vmatpush1.msra.mxu0 0.0
      %644 = vmatprep.subr.mxu0 0.0
      %645 = vmatpush1.msra.mxu0 0.0
      %646 = vmatprep.subr.mxu0 0.0
      %647 = vmatpush1.msra.mxu0 0.0
      %648 = vmatprep.subr.mxu0 0.0
      %649 = vmatpush1.msra.mxu0 0.0
      %650 = vmatprep.subr.mxu0 0.0
      %651 = vmatpush1.msra.mxu0 0.0
      %652 = vmatprep.subr.mxu0 0.0
      %653 = vmatpush1.msra.mxu0 0.0
      %654 = vmatprep.subr.mxu0 0.0
      %655 = vmatpush1.msra.mxu0 0.0
      %656 = vmatprep.subr.mxu0 0.0
      %657 = vmatpush1.msra.mxu0 0.0
      %658 = vmatprep.subr.mxu0 0.0
      %659 = vmatpush1.msra.mxu0 0.0
      %660 = vmatprep.subr.mxu0 0.0
      %661 = vmatpush1.msra.mxu0 0.0
      %662 = vmatprep.subr.mxu0 0.0
      %663 = vmatpush1.msra.mxu0 0.0
      %664 = vmatprep.subr.mxu0 0.0
      %665 = vmatpush1.msra.mxu0 0.0
      %666 = vmatprep.mubr.f32.mxu0 0.0
      %667 = vmatmul.mubr.f32.gmra.mrb[0].mxu0 %v484
      %v668 = vpop.f32.mrb[0].mxu0
      %v669 = vadd.f32 0.0, %v668
      %v670 = vpop.f32.mrb[0].mxu0
      %671 = vmatprep.mubr.f32.mxu0 0.0
      %672 = vmatmul.mubr.f32.gmra.mrb[0].mxu0 %v487
      %v673 = vpop.f32.mrb[0].mxu0
      %v674 = vadd.f32 0.0, %v673
      %v675 = vpop.f32.mrb[0].mxu0
      %676 = vmatprep.mubr.f32.mxu0 0.0
      %677 = vmatmul.mubr.f32.gmra.mrb[0].mxu0 %v490
      %v678 = vpop.f32.mrb[0].mxu0
      %v679 = vadd.f32 0.0, %v678
      %v680 = vpop.f32.mrb[0].mxu0
      %681 = vmatprep.mubr.f32.mxu0 0.0
      %682 = vmatmul.mubr.f32.gmra.mrb[0].mxu0 %v493
      %v683 = vpop.f32.mrb[0].mxu0
      %v684 = vadd.f32 0.0, %v683
      %v685 = vpop.f32.mrb[0].mxu0
      %686 = vmatprep.mubr.f32.mxu0 0.0
      %687 = vmatmul.mubr.f32.gmra.mrb[0].mxu0 %v496
      %v688 = vpop.f32.mrb[0].mxu0
      %v689 = vadd.f32 0.0, %v688
      %v690 = vpop.f32.mrb[0].mxu0
      %691 = vmatprep.mubr.f32.mxu0 0.0
      %692 = vmatmul.mubr.f32.gmra.mrb[0].mxu0 %v499
      %v693 = vpop.f32.mrb[0].mxu0
      %v694 = vadd.f32 0.0, %v693
      %v695 = vpop.f32.mrb[0].mxu0
      %696 = vdwg.mxu0
      %697 = vrot.lane.b32.xlu0 %v568, 18
      %v698 = vpop.permute.xlu0 %697
      %699 = vrot.lane.b32.xlu0 %v574, 18
      %v700 = vpop.permute.xlu0 %699
      %701 = vrot.lane.b32.xlu0 %v570, 18
      %v702 = vpop.permute.xlu0 %701
      %703 = vrot.lane.b32.xlu0 %v576, 18
      %v704 = vpop.permute.xlu0 %703
      %705 = vrot.lane.b32.xlu0 %v669, 18
      %v706 = vpop.permute.xlu0 %705
      %707 = vrot.lane.b32.xlu0 %v674, 18
      %v708 = vpop.permute.xlu0 %707
      %vm709 = vcmp.lt.s32.totalorder %v406, 18
      %v710 = vsel %vm709, %v702, %v706
      %v711 = vsel %vm709, %v704, %v708
      %v712 = vsel %vm709, %v698, %v702
      %v713 = vsel %vm709, %v700, %v704
      %v714 = vsel %vm709, %v706, %v698
      %v715 = vsel %vm709, %v708, %v700
      %717 = vset.pattern.permute.xlu0 0
      %718 = vperm.xlu0 %717, %v387
      %v719 = vpop.permute.xlu0 %718
      %722 = vset.pattern.permute.xlu0 0
      %723 = vperm.xlu0 %722, %v388
      %v724 = vpop.permute.xlu0 %723
      %v726 = vadd.f32 %v719, %v714
      %v727 = vadd.f32 %v719, %v712
      %v728 = vadd.f32 %v719, %v710
      %v729 = vadd.f32 %v724, %v715
      %v730 = vadd.f32 %v724, %v713
      %v731 = vadd.f32 %v724, %v711
      %v732 = vadd.f32 %v726, %v580
      %v733 = vadd.f32 %v727, %v582
      %v734 = vadd.f32 %v728, %v679
      %v735 = vadd.f32 %v729, %v586
      %v736 = vadd.f32 %v730, %v588
      %v737 = vadd.f32 %v731, %v684
      %738 = vrot.lane.b32.xlu0 %v592, 110
      %v739 = vpop.permute.xlu0 %738
      %740 = vrot.lane.b32.xlu0 %v598, 110
      %v741 = vpop.permute.xlu0 %740
      %742 = vrot.lane.b32.xlu0 %v594, 110
      %v743 = vpop.permute.xlu0 %742
      %744 = vrot.lane.b32.xlu0 %v600, 110
      %v745 = vpop.permute.xlu0 %744
      %746 = vrot.lane.b32.xlu0 %v689, 110
      %v747 = vpop.permute.xlu0 %746
      %748 = vrot.lane.b32.xlu0 %v694, 110
      %v749 = vpop.permute.xlu0 %748
      %vm750 = vcmp.lt.s32.totalorder %v406, 110
      %v751 = vsel %vm750, %v743, %v747
      %v752 = vsel %vm750, %v745, %v749
      %v753 = vsel %vm750, %v739, %v743
      %v754 = vsel %vm750, %v741, %v745
      %v755 = vsel %vm750, %v747, %v739
      %v756 = vsel %vm750, %v749, %v741
      %v757 = vadd.f32 %v732, %v753
      %v758 = vadd.f32 %v733, %v751
      %v759 = vadd.f32 %v734, %v755
      %v760 = vadd.f32 %v735, %v754
      %v761 = vadd.f32 %v736, %v752
      %v762 = vadd.f32 %v737, %v756
      %v763 = vxor.u32 %v757, 2147483648
      %v764 = vxor.u32 %v758, 2147483648
      %v765 = vxor.u32 %v759, 2147483648
      %v766 = vmul.f32 %v763, 1.442695
      %v767 = vpow.pop %v766
      %v768 = vmul.f32 %v764, 1.442695
      %v769 = vpow.pop %v768
      %v770 = vmul.f32 %v765, 1.442695
      %v771 = vpow.pop %v770
      %v772 = vadd.f32 %v767, 1.0
      %v773 = vadd.f32 %v769, 1.0
      %v774 = vadd.f32 %v771, 1.0
      %v775 = vrcp.pop %v772
      %v776 = vmul.f32 1.0, %v775
      %v777 = vrcp.pop %v773
      %v778 = vmul.f32 1.0, %v777
      %v779 = vrcp.pop %v774
      %v780 = vmul.f32 1.0, %v779
      %v781 = vxor.u32 %v760, 2147483648
      %v782 = vxor.u32 %v761, 2147483648
      %v783 = vxor.u32 %v762, 2147483648
      %v784 = vmul.f32 %v781, 1.442695
      %v785 = vpow.pop %v784
      %v786 = vmul.f32 %v782, 1.442695
      %v787 = vpow.pop %v786
      %v788 = vmul.f32 %v783, 1.442695
      %v789 = vpow.pop %v788
      %v790 = vadd.f32 %v785, 1.0
      %v791 = vadd.f32 %v787, 1.0
      %v792 = vadd.f32 %v789, 1.0
      %v793 = vrcp.pop %v790
      %v794 = vmul.f32 1.0, %v793
      %v795 = vrcp.pop %v791
      %v796 = vmul.f32 1.0, %v795
      %v797 = vrcp.pop %v792
      %v798 = vmul.f32 1.0, %v797
      %v799 = vtanh.pop %v760
      %v800 = vtanh.pop %v761
      %v801 = vtanh.pop %v762
      %v804 = vcombine.low %v393, %v393
      %v805 = vcombine.low %v394, %v394
      %v808 = vmul.f32 %v776, %v804
      %v809 = vmul.f32 %v778, %v393
      %v810 = vmul.f32 %v780, %v805
      %v814 = vrot.slane %v799, 4
      %v815 = vrot.slane %v800, 4
      %v816 = vrot.slane %v801, 4
      %v820 = vmul.f32 %v776, %v814
      %v821 = vmul.f32 %v778, %v815
      %v822 = vmul.f32 %v780, %v816
      %v826 = vrot.slane %v820, 4
      %v827 = vrot.slane %v821, 4
      %v828 = vrot.slane %v822, 4
      %v832 = vadd.f32 %v808, %v826
      %v833 = vadd.f32 %v809, %v827
      %v834 = vadd.f32 %v810, %v828
      %v836 = vlaneseq
      %v837 = vshrl.u32 %v836, 7
      %v838 = vsub.s32 0, %v837
      %v839 = vrot.slane %v380, %v838
      %v840 = vlaneseq
      %v841 = vshrl.u32 %v840, 7
      %v842 = vsub.s32 1, %v841
      %v843 = vrot.slane %v380, %v842
      %v844 = vlaneseq
      %v845 = vshrl.u32 %v844, 7
      %v846 = vsub.s32 2, %v845
      %v847 = vrot.slane %v380, %v846
      %v851 = vmul.f32 %v832, %v839
      %v852 = vmul.f32 %v833, %v843
      %v853 = vmul.f32 %v834, %v847
      %v854 = vtanh.pop %v851
      %v855 = vtanh.pop %v852
      %v856 = vtanh.pop %v853
      %v860 = vrot.slane %v854, 4
      %v861 = vrot.slane %v855, 4
      %v862 = vrot.slane %v856, 4
      %v866 = vmul.f32 %v794, %v860
      %v867 = vmul.f32 %v796, %v861
      %v868 = vmul.f32 %v798, %v862
      %v869 = vmul.f32 %v866, %v839
      %v870 = vmul.f32 %v867, %v843
      %v871 = vmul.f32 %v868, %v847
      %v874 = vcombine.low %v869, %v870
      %876 = vst [vmem:[#allocation2] sm:$0xff] %v874
      %877 = vst [vmem:[#allocation2 + $0x8] sm:$0xf] %v871
      %v881 = vcombine.high %v851, %v852
      %v882 = vcombine.high %v853, %v853
      %885 = vst [vmem:[#allocation3] sm:$0xff] %v881
      %886 = vst [vmem:[#allocation3 + $0x8] sm:$0xf] %v882
      %v887 = vld [vmem:[%s343] sm:$0xf]
      %v888 = vld [vmem:[%s362] sm:$0xff]
      %v889 = vld [vmem:[%s362 + $0x8] sm:$0xf]
      %v890 = vld [vmem:[%s347] sm:$0xf]
      %892 = vset.pattern.permute.xlu0 0
      %893 = vperm.xlu0 %892, %v890
      %v894 = vpop.permute.xlu0 %893
      %v898 = vcombine.high %v888, %v888
      %vm899 = vcmask 31744
      %v901 = vsel %vm899, %v887, 0
      %v903 = vsel %vm425, %v888, 0
      %v905 = vsel %vm425, %v898, 0
      %v907 = vsel %vm425, %v889, 0
      %909 = vmatprep.subr.mxu0 %v905
      %910 = vmatpush1.msra.mxu0 %v903
      %911 = vmatprep.subr.mxu0 0.0
      %912 = vmatpush1.msra.mxu0 0.0
      %913 = vmatprep.subr.mxu0 0.0
      %914 = vmatpush1.msra.mxu0 0.0
      %915 = vmatprep.subr.mxu0 0.0
      %916 = vmatpush1.msra.mxu0 0.0
      %917 = vmatprep.subr.mxu0 0.0
      %918 = vmatpush1.msra.mxu0 0.0
      %919 = vmatprep.subr.mxu0 0.0
      %920 = vmatpush1.msra.mxu0 0.0
      %921 = vmatprep.subr.mxu0 0.0
      %922 = vmatpush1.msra.mxu0 0.0
      %923 = vmatprep.subr.mxu0 0.0
      %924 = vmatpush1.msra.mxu0 0.0
      %925 = vmatprep.subr.mxu0 0.0
      %926 = vmatpush1.msra.mxu0 0.0
      %927 = vmatprep.subr.mxu0 0.0
      %928 = vmatpush1.msra.mxu0 0.0
      %929 = vmatprep.subr.mxu0 0.0
      %930 = vmatpush1.msra.mxu0 0.0
      %931 = vmatprep.subr.mxu0 0.0
      %932 = vmatpush1.msra.mxu0 0.0
      %933 = vmatprep.subr.mxu0 0.0
      %934 = vmatpush1.msra.mxu0 0.0
      %935 = vmatprep.subr.mxu0 0.0
      %936 = vmatpush1.msra.mxu0 0.0
      %937 = vmatprep.subr.mxu0 0.0
      %938 = vmatpush1.msra.mxu0 0.0
      %939 = vmatprep.subr.mxu0 0.0
      %940 = vmatpush1.msra.mxu0 0.0
      %941 = vmatprep.subr.mxu0 0.0
      %942 = vmatpush1.msra.mxu0 0.0
      %943 = vmatprep.subr.mxu0 0.0
      %944 = vmatpush1.msra.mxu0 0.0
      %945 = vmatprep.subr.mxu0 0.0
      %946 = vmatpush1.msra.mxu0 0.0
      %947 = vmatprep.subr.mxu0 0.0
      %948 = vmatpush1.msra.mxu0 0.0
      %949 = vmatprep.subr.mxu0 0.0
      %950 = vmatpush1.msra.mxu0 0.0
      %951 = vmatprep.subr.mxu0 0.0
      %952 = vmatpush1.msra.mxu0 0.0
      %953 = vmatprep.subr.mxu0 0.0
      %954 = vmatpush1.msra.mxu0 0.0
      %955 = vmatprep.subr.mxu0 0.0
      %956 = vmatpush1.msra.mxu0 0.0
      %957 = vmatprep.subr.mxu0 0.0
      %958 = vmatpush1.msra.mxu0 0.0
      %959 = vmatprep.subr.mxu0 0.0
      %960 = vmatpush1.msra.mxu0 0.0
      %961 = vmatprep.subr.mxu0 0.0
      %962 = vmatpush1.msra.mxu0 0.0
      %963 = vmatprep.subr.mxu0 0.0
      %964 = vmatpush1.msra.mxu0 0.0
      %965 = vmatprep.subr.mxu0 0.0
      %966 = vmatpush1.msra.mxu0 0.0
      %967 = vmatprep.subr.mxu0 0.0
      %968 = vmatpush1.msra.mxu0 0.0
      %969 = vmatprep.subr.mxu0 0.0
      %970 = vmatpush1.msra.mxu0 0.0
      %971 = vmatprep.subr.mxu0 0.0
      %972 = vmatpush1.msra.mxu0 0.0
      %973 = vmatprep.mubr.f32.mxu0 0.0
      %974 = vmatmul.mubr.f32.gmra.mrb[0].mxu0 %v901
      %v975 = vpop.f32.mrb[0].mxu0
      %v976 = vadd.f32 %v894, %v975
      %v977 = vpop.f32.mrb[0].mxu0
      %v978 = vadd.f32 %v894, %v977
      %979 = vdwg.mxu0
      %980 = vmatprep.subr.mxu0 0.0
      %981 = vmatpush1.msra.mxu0 %v907
      %982 = vmatprep.subr.mxu0 0.0
      %983 = vmatpush1.msra.mxu0 0.0
      %984 = vmatprep.subr.mxu0 0.0
      %985 = vmatpush1.msra.mxu0 0.0
      %986 = vmatprep.subr.mxu0 0.0
      %987 = vmatpush1.msra.mxu0 0.0
      %988 = vmatprep.subr.mxu0 0.0
      %989 = vmatpush1.msra.mxu0 0.0
      %990 = vmatprep.subr.mxu0 0.0
      %991 = vmatpush1.msra.mxu0 0.0
      %992 = vmatprep.subr.mxu0 0.0
      %993 = vmatpush1.msra.mxu0 0.0
      %994 = vmatprep.subr.mxu0 0.0
      %995 = vmatpush1.msra.mxu0 0.0
      %996 = vmatprep.subr.mxu0 0.0
      %997 = vmatpush1.msra.mxu0 0.0
      %998 = vmatprep.subr.mxu0 0.0
      %999 = vmatpush1.msra.mxu0 0.0
      %1000 = vmatprep.subr.mxu0 0.0
      %1001 = vmatpush1.msra.mxu0 0.0
      %1002 = vmatprep.subr.mxu0 0.0
      %1003 = vmatpush1.msra.mxu0 0.0
      %1004 = vmatprep.subr.mxu0 0.0
      %1005 = vmatpush1.msra.mxu0 0.0
      %1006 = vmatprep.subr.mxu0 0.0
      %1007 = vmatpush1.msra.mxu0 0.0
      %1008 = vmatprep.subr.mxu0 0.0
      %1009 = vmatpush1.msra.mxu0 0.0
      %1010 = vmatprep.subr.mxu0 0.0
      %1011 = vmatpush1.msra.mxu0 0.0
      %1012 = vmatprep.subr.mxu0 0.0
      %1013 = vmatpush1.msra.mxu0 0.0
      %1014 = vmatprep.subr.mxu0 0.0
      %1015 = vmatpush1.msra.mxu0 0.0
      %1016 = vmatprep.subr.mxu0 0.0
      %1017 = vmatpush1.msra.mxu0 0.0
      %1018 = vmatprep.subr.mxu0 0.0
      %1019 = vmatpush1.msra.mxu0 0.0
      %1020 = vmatprep.subr.mxu0 0.0
      %1021 = vmatpush1.msra.mxu0 0.0
      %1022 = vmatprep.subr.mxu0 0.0
      %1023 = vmatpush1.msra.mxu0 0.0
      %1024 = vmatprep.subr.mxu0 0.0
      %1025 = vmatpush1.msra.mxu0 0.0
      %1026 = vmatprep.subr.mxu0 0.0
      %1027 = vmatpush1.msra.mxu0 0.0
      %1028 = vmatprep.subr.mxu0 0.0
      %1029 = vmatpush1.msra.mxu0 0.0
      %1030 = vmatprep.subr.mxu0 0.0
      %1031 = vmatpush1.msra.mxu0 0.0
      %1032 = vmatprep.subr.mxu0 0.0
      %1033 = vmatpush1.msra.mxu0 0.0
      %1034 = vmatprep.subr.mxu0 0.0
      %1035 = vmatpush1.msra.mxu0 0.0
      %1036 = vmatprep.subr.mxu0 0.0
      %1037 = vmatpush1.msra.mxu0 0.0
      %1038 = vmatprep.subr.mxu0 0.0
      %1039 = vmatpush1.msra.mxu0 0.0
      %1040 = vmatprep.subr.mxu0 0.0
      %1041 = vmatpush1.msra.mxu0 0.0
      %1042 = vmatprep.subr.mxu0 0.0
      %1043 = vmatpush1.msra.mxu0 0.0
      %1044 = vmatprep.mubr.f32.mxu0 0.0
      %1045 = vmatmul.mubr.f32.gmra.mrb[0].mxu0 %v901
      %v1046 = vpop.f32.mrb[0].mxu0
      %v1047 = vadd.f32 %v894, %v1046
      %v1048 = vpop.f32.mrb[0].mxu0
      %1049 = vdwg.mxu0
      %v1050 = vadd.f32 %v976, %v869
      %v1051 = vadd.f32 %v978, %v870
      %v1052 = vadd.f32 %v1047, %v871
      %v1055 = vcombine.low %v1050, %v1051
      %1057 = vst [vmem:[%s371] sm:$0xff] %v1055
      %1058 = vst [vmem:[%s371 + $0x8] sm:$0xf] %v1052
      %p1059 = scmp.lt.s32.totalorder %s22, 1
      %s1060 = scalar_select %p1059, %s22, 1
      %p1061 = scmp.lt.s32.totalorder %s23, 1
      %s1062 = scalar_select %p1061, %s23, 1
      %s1063 = smul.addr %s1062, 3
      %s1064 = smul.addr %s1060, 6
      %s1065 = sadd.s32 %s1063, %s1064
      %s1066 = smul.addr %s1065, 4
      %s1067 = scalar_lea.vmem %s7, %s1066
      // Predicated region
      $region53: #{aedet_forward.1} parent=47 // pred_check
        %p1068 = pneg %p219
      $region54: #{aedet_forward.1} parent=47 // pred_check_branch
        %1070 = sbr.rel (%p1068) target = $region56
      $region55: #{aedet_forward.1} parent=47 // pred_region
        _
      $region56: #{aedet_forward.1} parent=47 // pred_fallthru
        _
    $region48: #{aedet_forward.1} parent=5 // pred_fallthru
      _
    %p1071 = scmp.le.s32.totalorder 2, %s13
    // Predicated region
    $region57: #{aedet_forward.1} parent=5 // pred_check
      %p1072 = pneg %p1071
    $region58: #{aedet_forward.1} parent=5 // pred_check_branch
      %1074 = sbr.rel (%p1072) target = $region60
    $region59: #{aedet_forward.1} parent=5 // pred_region
      %s1075 = ssub.s32 %s13, 2
      // Predicated region
      $region61: #{aedet_forward.1} parent=59 // pred_check
        %p1076 = pneg %p225
      $region62: #{aedet_forward.1} parent=59 // pred_check_branch
        %1078 = sbr.rel (%p1076) target = $region64
      $region63: #{aedet_forward.1} parent=59 // pred_region
        %p1079 = scmp.lt.s32.totalorder %s24, 1
        %s1080 = scalar_select %p1079, %s24, 1
        %p1081 = scmp.lt.s32.totalorder %s25, 1
        %s1082 = scalar_select %p1081, %s25, 1
        %s1083 = smul.addr %s1082, 3
        %s1084 = smul.addr %s1080, 6
        %s1085 = sadd.s32 %s1083, %s1084
        %s1086 = smul.addr %s1085, 4
        %s1087 = scalar_lea.vmem %s7, %s1086
      $region64: #{aedet_forward.1} parent=59 // pred_fallthru
        _
    $region60: #{aedet_forward.1} parent=5 // pred_fallthru
      _
  $region6: #{aedet_forward.1} parent=0 // loop_footer
    %s17 = sadd.s32 1, %s13
  $region7: #{aedet_forward.1} parent=0 // loop_footer_branch
    %12 = sbr.rel target = $region3
  $region8: #{aedet_forward.1} parent=0 // loop_exit
    _

</llo_original>
